<compile_context>
chip_gen: v7x
topology: tpu7x:2x2x1
jax: 0.10.0
libtpu: 0.0.40
codegen_flags: <defaults>
</compile_context>

<pallas_src>
import numpy as np
import jax
import jax.numpy as jnp
from jax.experimental import pallas as pl
from jax.experimental.pallas import tpu as pltpu


def _nce_softmax_loss_kernel(x_ref, o_ref):
    """x_ref: (tb, K) logits block; o_ref: (tb, 1) per-row loss.

    Target label is always class 0, so
        loss = logsumexp(x, axis=-1) - x[:, 0]
    computed with the numerically stable (max-shifted) logsumexp.
    """
    x = x_ref[...].astype(jnp.float32)                     # (tb, K)
    m = jnp.max(x, axis=-1, keepdims=True)                 # XLU row reduce
    s = jnp.sum(jnp.exp(x - m), axis=-1, keepdims=True)    # EUP exp + XLU sum
    lse = m + jnp.log(s)                                   # EUP log
    o_ref[...] = (lse - x[:, 0:1]).astype(o_ref.dtype)


def nce_softmax_loss(x, block_b=512, vmem_budget_per_buf=8 << 20):
    """Pallas equivalent of NCESoftmaxLoss().forward(x).

    x: array whose squeeze() is 2-D, e.g. (bsz, n_classes, 1) or
       (bsz, n_classes).  Returns per-sample loss of shape (bsz,).
    """
    # Mirror torch's x.squeeze(): drop all size-1 dims.
    x2 = jnp.squeeze(x)
    if x2.ndim != 2:
        raise ValueError(
            f"NCESoftmaxLoss expects squeeze(x) to be 2-D, got {x2.shape}")
    B, K = x2.shape

    # Batch tile: whole batch in one block when small; otherwise sublane-
    # aligned tiles sized so one (double-buffered) input block stays inside a
    # conservative per-buffer VMEM budget even for very large class counts.
    bytes_per_row = K * jnp.dtype(x2.dtype).itemsize
    max_rows = max(8, int(vmem_budget_per_buf // max(bytes_per_row, 1)))
    tb = min(block_b, max_rows)
    tb = max(8, (tb // 8) * 8)          # keep tiles sublane-aligned
    if B <= tb:
        tb = B                          # single full-array block
    grid = (pl.cdiv(B, tb),)

    out = pl.pallas_call(
        _nce_softmax_loss_kernel,
        out_shape=jax.ShapeDtypeStruct((B, 1), x2.dtype),
        grid=grid,
        in_specs=[pl.BlockSpec((tb, K), lambda i: (i, 0))],
        out_specs=pl.BlockSpec((tb, 1), lambda i: (i, 0)),
        compiler_params=pltpu.CompilerParams(
            dimension_semantics=("parallel",),
            vmem_limit_bytes=64 << 20,
        ),
    )(x2)
    return out[:, 0]


def _reference_loss(x):
    """Pure-JAX reference: CrossEntropyLoss(reduction='none') with label 0."""
    x2 = jnp.squeeze(x)
    return jax.scipy.special.logsumexp(x2.astype(jnp.float32), axis=-1) - \
        x2[:, 0].astype(jnp.float32)


if __name__ == "__main__":
    key = jax.random.PRNGKey(0)

    # (a) Small CPC-style input: bsz=8, 1 positive + 32 negatives, trailing
    #     singleton dim (as produced by an NCE head) -> squeeze() -> (8, 33).
    x_a = jax.random.normal(key, (8, 33, 1), dtype=jnp.float32)
    out_a = jax.block_until_ready(nce_softmax_loss(x_a))
    ref_a = _reference_loss(x_a)
    np.testing.assert_allclose(np.asarray(out_a), np.asarray(ref_a),
                               rtol=1e-5, atol=1e-5)
    assert out_a.shape == (8,)

    # (b) Larger batch to exercise the tiled, parallel-grid path (including a
    #     ragged final tile: 1000 rows with 256-row tiles).
    key_b = jax.random.PRNGKey(1)
    x_b = jax.random.normal(key_b, (1000, 257), dtype=jnp.float32)
    out_b = jax.block_until_ready(nce_softmax_loss(x_b, block_b=256))
    ref_b = _reference_loss(x_b)
    np.testing.assert_allclose(np.asarray(out_b), np.asarray(ref_b),
                               rtol=1e-5, atol=1e-5)
    assert out_b.shape == (1000,)

    print("KERNEL_OK")
</pallas_src>

<mosaic_0001>
module attributes {stable_mosaic.version = 11 : i64} {
  func.func @_nce_softmax_loss_kernel(%arg0: i32, %arg1: memref<8x33xf32, #tpu.memory_space<vmem>>, %arg2: memref<8x1xf32, #tpu.memory_space<vmem>>) attributes {dimension_semantics = [#tpu.dimension_semantics<parallel>], iteration_bounds = array<i64: 1>, scalar_prefetch = 0 : i64, scratch_operands = 0 : i64, tpu.core_type = #tpu.core_type<tc>, window_params = [{transform_indices = @transform_0, window_bounds = array<i64: 8, 33>}, {transform_indices = @transform_1, window_bounds = array<i64: 8, 1>}]} {
    %c0 = arith.constant 0 : index
    %c0_0 = arith.constant 0 : index
    %0 = vector.load %arg1[%c0, %c0_0] : memref<8x33xf32, #tpu.memory_space<vmem>>, vector<8x33xf32>
    %cst = arith.constant dense<0xFF800000> : vector<8xf32>
    %1 = vector.multi_reduction <maximumf>, %0, %cst [1] : vector<8x33xf32> to vector<8xf32>
    %2 = vector.shape_cast %1 : vector<8xf32> to vector<8x1xf32>
    %3 = vector.broadcast %2 : vector<8x1xf32> to vector<8x33xf32>
    %4 = arith.subf %0, %3 : vector<8x33xf32>
    %5 = math.exp %4 : vector<8x33xf32>
    %cst_1 = arith.constant dense<0.000000e+00> : vector<8xf32>
    %6 = vector.multi_reduction <add>, %5, %cst_1 [1] : vector<8x33xf32> to vector<8xf32>
    %7 = vector.shape_cast %6 : vector<8xf32> to vector<8x1xf32>
    %8 = math.log %7 : vector<8x1xf32>
    %9 = arith.addf %2, %8 : vector<8x1xf32>
    %10 = vector.extract_strided_slice %0 {offsets = [0, 0], sizes = [8, 1], strides = [1, 1]} : vector<8x33xf32> to vector<8x1xf32>
    %11 = arith.subf %9, %10 : vector<8x1xf32>
    %c0_2 = arith.constant 0 : index
    %c0_3 = arith.constant 0 : index
    %12 = vector.load %arg2[%c0_2, %c0_3] : memref<8x1xf32, #tpu.memory_space<vmem>>, vector<8x1xf32>
    tpu.vector_store %arg2[%c0_2, %c0_3], %11 {strides = array<i32>} : memref<8x1xf32, #tpu.memory_space<vmem>>, vector<8x1xf32>,
    return
  }
  func.func @transform_0(%arg0: i32) -> (i32, i32) {
    %c0_i32 = arith.constant 0 : i32
    %c0_i32_0 = arith.constant 0 : i32
    return %arg0, %c0_i32 : i32, i32
  }
  func.func @transform_1(%arg0: i32) -> (i32, i32) {
    %c0_i32 = arith.constant 0 : i32
    %c0_i32_0 = arith.constant 0 : i32
    return %arg0, %c0_i32 : i32, i32
  }
}

</mosaic_0001>

<llo_original>
// kernel: tpu_custom_call.1
$region0: #{tpu_custom_call.1}
  #allocation0 [shape = 'u32[]', space=smem, size = 0x4, offset = 0x4, fixed_abs, tag = 'smem constant byte address 0x4 - core index']
  #allocation1 [shape = 'u32[144,128]{1,0:T(1,128)}', space=vmem, size = 0x12000, scoped, tag = 'internal scratch']
  %s0 = inlined_call_operand.hbm [shape: f32[8,33], index: 0, kind: input, shape index: {}]
  %s1 = inlined_call_operand.hbm [shape: f32[8,1], index: 1, kind: output, shape index: {}]
  %s2 = sld [smem:[#allocation0]]
  $region18: #{tpu_custom_call.1} parent=0
    _
  %s4 = ssub.s32 1, %s2
  %s5 = scalar_select 0, %s4, %s2
  $region1: #{tpu_custom_call.1} parent=0
    #allocation2 [shape = 'u8[4096]{0}', space=vmem, size = 0x1000, scoped, tag = 'input window, operand 0, single buffered']
    #allocation3 [shape = 's32[1]{0}', space=sflag, size = 0x4, scoped, tag = 'scoped memory for tpu_custom_call.1']
    #allocation4 [shape = 's32[1]{0}', space=sflag, size = 0x4, scoped, tag = 'scoped memory for tpu_custom_call.1']
    #allocation5 [shape = 'u8[4096]{0}', space=vmem, size = 0x1000, scoped, tag = 'output window, operand 0, single buffered']
    %6 = vsyncpa [#allocation3], 0
    %7 = vsyncpa [#allocation4], 0
    // Predicated region
    $region2: #{tpu_custom_call.1} parent=1 // pred_check
      _
    $region3: #{tpu_custom_call.1} parent=1 // pred_check_branch
      %9 = sbr.rel (0) target = $region5
    $region4: #{tpu_custom_call.1} parent=1 // pred_region
      %s11 = ssub.s32 128, 128
      %12 = vsyncadd [#allocation3], %s11
      %s14 = sshll.u32 [#allocation2], 4
      %s15 = int_to_ptr.vmem [resolvable:$true] %s14
      %17 = dma.hbm_to_vmem [thread:$0]  %s0, 128, %s15, [#allocation3]
    $region5: #{tpu_custom_call.1} parent=1 // pred_fallthru
      _
    // Predicated region
    $region6: #{tpu_custom_call.1} parent=1 // pred_check
      _
    $region7: #{tpu_custom_call.1} parent=1 // pred_check_branch
      %19 = sbr.rel (0) target = $region9
    $region8: #{tpu_custom_call.1} parent=1 // pred_region
      %20 = dma.done [#allocation3], 128
    $region9: #{tpu_custom_call.1} parent=1 // pred_fallthru
      _
    %v21 = vld [vmem:[#allocation2] sm:$0xff]
    %vm22 = vcmask 269312
    %v23 = vsel %vm22, %v21, -inf
    %24 = vmax.xlane.f32.xlu0 %v23
    %v25 = vpop.xlane.xlu0 %24
    %v26 = vsub.f32 %v21, %v25
    %v27 = vmul.f32 %v26, 1.442695
    %v28 = vpow.pop %v27
    %v29 = vsel %vm22, %v28, 0.0
    %30 = vadd.xlane.f32.xlu0 %v29
    %v31 = vpop.xlane.xlu0 %30
    %v32 = vlog2.pop %v31
    %v33 = vmul.f32 %v32, 0.6931472
    %v34 = vadd.f32 %v25, %v33
    %v35 = vsub.f32 %v34, %v21
    %vm36 = vcmask 7168
    %37 = vst.msk [vmem:[#allocation5] sm:$0xff] %vm36, %v35
    // Predicated region
    $region10: #{tpu_custom_call.1} parent=1 // pred_check
      _
    $region11: #{tpu_custom_call.1} parent=1 // pred_check_branch
      %39 = sbr.rel (0) target = $region13
    $region12: #{tpu_custom_call.1} parent=1 // pred_region
      %s41 = ssub.s32 128, 128
      %42 = vsyncadd [#allocation4], %s41
      %s44 = sshll.u32 [#allocation5], 4
      %s45 = int_to_ptr.vmem [resolvable:$true] %s44
      %47 = dma.vmem_to_hbm [thread:$0]  %s45, 128, %s1, [#allocation4]
    $region13: #{tpu_custom_call.1} parent=1 // pred_fallthru
      _
    // Predicated region
    $region14: #{tpu_custom_call.1} parent=1 // pred_check
      _
    $region15: #{tpu_custom_call.1} parent=1 // pred_check_branch
      %49 = sbr.rel (0) target = $region17
    $region16: #{tpu_custom_call.1} parent=1 // pred_region
      %50 = dma.done [#allocation4], 128
    $region17: #{tpu_custom_call.1} parent=1 // pred_fallthru
      _
    %51 = vsyncpa [#allocation3], 1
    %52 = vsyncpa [#allocation4], 1

</llo_original>
